<compile_context>
chip_gen: v7x
topology: tpu7x:2x2x1
jax: 0.10.0
libtpu: 0.0.40
codegen_flags: <defaults>
</compile_context>

<pallas_src>
import jax
import jax.numpy as jnp
from jax.experimental import pallas as pl
from jax.experimental.pallas import tpu as pltpu


def hetnet_kernel(x_ref, w1_ref, b1_ref, g_ref, be_ref,
                  wh1_ref, bh1_ref, wh2_ref, bh2_ref, w3_ref, b3_ref,
                  out_ref):
    # ---- fc1: (TN,F)bf16 @ (F,H)bf16 -> f32 acc, + b (f32) ----
    x = x_ref[...].astype(jnp.bfloat16)                              # (TN, F)
    h = jnp.dot(x, w1_ref[...],
                preferred_element_type=jnp.float32) + b1_ref[...]

    # ---- LayerNorm over last dim (H), eps = 1e-5 (torch default), f32 ----
    mu = jnp.mean(h, axis=-1, keepdims=True)
    d = h - mu
    var = jnp.mean(d * d, axis=-1, keepdims=True)
    h = d * jax.lax.rsqrt(var + 1e-5)
    h = h * g_ref[...] + be_ref[...]

    # ---- ReLU (dropout is identity in eval mode) ----
    h = jnp.maximum(h, 0.0)

    # ---- out(H->H) folded into head fc1: (TN,H) @ (H,128-pad) + b, ReLU ----
    h = jnp.maximum(
        jnp.dot(h.astype(jnp.bfloat16), wh1_ref[...],
                preferred_element_type=jnp.float32) + bh1_ref[...],
        0.0)

    # ---- head fc2 (80->10, lane-padded to 128), ReLU ----
    h = jnp.maximum(
        jnp.dot(h.astype(jnp.bfloat16), wh2_ref[...],
                preferred_element_type=jnp.float32) + bh2_ref[...],
        0.0)

    # ---- head fc3 (10->1): VPU multiply + lane reduction (no MXU pass) ----
    out_ref[...] = (jnp.sum(h * w3_ref[...], axis=-1, keepdims=True)
                    + b3_ref[...])


def _round_up(n, m):
    return ((n + m - 1) // m) * m


def _resident(shape):
    # Full-array block with a constant block index: the weight/bias is DMA'd
    # once and stays resident in VMEM across the whole grid.
    return pl.BlockSpec(shape, lambda i: tuple(0 for _ in shape))


def hetnet_forward(x, params, *, tile_n=1024):
    """x: (N, F) float32. Returns (N,) float32 (matches torch reshape([-1]))."""
    N, F = x.shape
    H = params["w1"].shape[1]
    PAD = H  # lane padding of the head (80 / 10 -> 128)

    def pad_cols(w, n):
        return jnp.pad(w, ((0, 0), (0, n - w.shape[1])))

    def pad_rows_cols(w, nr, nc):
        return jnp.pad(w, ((0, nr - w.shape[0]), (0, nc - w.shape[1])))

    # Fold `out` (H->H) into the head fc1 (no nonlinearity in between); the
    # fold is done in f32, then the fused weight is stored as bf16.
    wh1 = params["wo"] @ params["wf1"]                        # (H, 80)
    bh1 = params["bo"] @ params["wf1"] + params["bf1"]        # (1, 80)
    wh1 = pad_cols(wh1, PAD).astype(jnp.bfloat16)             # (H, 128) bf16
    bh1 = pad_cols(bh1, PAD)                                  # (1, 128) f32
    wh2 = pad_rows_cols(params["wf2"], PAD, PAD).astype(jnp.bfloat16)
    bh2 = pad_cols(params["bf2"], PAD)                        # (1, 128) f32
    w1 = params["w1"].astype(jnp.bfloat16)                    # (F, H) bf16
    # fc3 weight (10,1) -> lane-dense row (1,128) f32; bf3 stays (1,1).
    w3 = pad_cols(params["wf3"].T, PAD)                       # (1, 128)
    b3 = params["bf3"]                                        # (1, 1)

    # Row tiling: pad N so the (8,128) BlockSpec rule holds and tiles divide N.
    max_tn = _round_up(N, 8)
    TN = min(tile_n, max_tn)
    # v7x has 2 TensorCores: guarantee >= 2 grid steps (when splittable) so
    # the "parallel" row axis can shard across both (no-op on v5e/v6e).
    if TN == max_tn and N > 8:
        TN = _round_up(-(-N // 2), 8)
    n_pad = _round_up(N, TN)
    x_p = jnp.pad(x, ((0, n_pad - N), (0, 0)))

    # mask = arange(N) -> identity gather, nothing to do.
    args = (
        x_p,
        w1, params["b1"], params["gamma"], params["beta"],
        wh1, bh1, wh2, bh2, w3, b3,
    )

    in_specs = [pl.BlockSpec((TN, F), lambda i: (i, 0))]
    in_specs += [_resident(a.shape) for a in args[1:]]

    flops = 2 * n_pad * (F * H + H * PAD + PAD * PAD + PAD)
    bytes_accessed = int(
        x_p.size * x_p.dtype.itemsize
        + sum(a.size * a.dtype.itemsize for a in args[1:])
        + n_pad * 4)

    out = pl.pallas_call(
        hetnet_kernel,
        out_shape=jax.ShapeDtypeStruct((n_pad, 1), jnp.float32),
        grid=(n_pad // TN,),
        in_specs=in_specs,
        out_specs=pl.BlockSpec((TN, 1), lambda i: (i, 0)),
        compiler_params=pltpu.CompilerParams(
            dimension_semantics=("parallel",)),
        cost_estimate=pl.CostEstimate(
            flops=flops, transcendentals=n_pad,
            bytes_accessed=bytes_accessed),
    )(*args)

    # Padded rows are dropped; torch does reshape([-1]) on the (N,1) result.
    return out[:N, 0]


def init_params(key, num_feature, n_hidden):
    ks = jax.random.split(key, 10)

    def lin(k, fan_in, fan_out):
        # deterministic "kaiming-ish" init; values are arbitrary but fixed
        w = jax.random.normal(k, (fan_in, fan_out), jnp.float32) / jnp.sqrt(fan_in)
        b = jnp.zeros((1, fan_out), jnp.float32)
        return w, b

    w1, b1 = lin(ks[0], num_feature, n_hidden)
    wo, bo = lin(ks[1], n_hidden, n_hidden)
    wf1, bf1 = lin(ks[2], n_hidden, 80)
    wf2, bf2 = lin(ks[3], 80, 10)
    wf3, bf3 = lin(ks[4], 10, 1)
    gamma = jnp.ones((1, n_hidden), jnp.float32)   # LayerNorm affine defaults
    beta = jnp.zeros((1, n_hidden), jnp.float32)
    return dict(w1=w1, b1=b1, gamma=gamma, beta=beta, wo=wo, bo=bo,
                wf1=wf1, bf1=bf1, wf2=wf2, bf2=bf2, wf3=wf3, bf3=bf3)


def reference_forward(x, p):
    """Pure-JAX f32 reference of the original (unfused) torch math."""
    h = x @ p["w1"] + p["b1"]
    mu = h.mean(-1, keepdims=True)
    var = ((h - mu) ** 2).mean(-1, keepdims=True)
    h = (h - mu) / jnp.sqrt(var + 1e-5) * p["gamma"] + p["beta"]
    h = jnp.maximum(h, 0.0)
    h = h @ p["wo"] + p["bo"]
    h = jnp.maximum(h @ p["wf1"] + p["bf1"], 0.0)
    h = jnp.maximum(h @ p["wf2"] + p["bf2"], 0.0)
    h = h @ p["wf3"] + p["bf3"]
    return h.reshape(-1)


if __name__ == "__main__":
    # nodes, num_feature, n_hidden (torch default 128); N=64 exercises the
    # multi-step (>=2 tiles) row grid.
    N, F, H = 64, 16, 128
    key = jax.random.PRNGKey(0)
    kx, kp = jax.random.split(key)
    x = jax.random.normal(kx, (N, F), jnp.float32)
    params = init_params(kp, F, H)

    out = hetnet_forward(x, params)
    out = jax.block_until_ready(out)

    ref = reference_forward(x, params)
    assert out.shape == (N,)
    # Tolerance accounts for the intentional bf16 MXU operands + the wo@wf1
    # fold (values are O(0.1-1), observed error is ~1e-2 absolute).
    assert jnp.allclose(out, ref, atol=5e-2, rtol=5e-2), (out, ref)
    print("KERNEL_OK")
</pallas_src>

<mosaic_0001>
module attributes {stable_mosaic.version = 11 : i64} {
  func.func @hetnet_kernel(%arg0: i32, %arg1: memref<32x16xf32, #tpu.memory_space<vmem>>, %arg2: memref<16x128xbf16, #tpu.memory_space<vmem>>, %arg3: memref<1x128xf32, #tpu.memory_space<vmem>>, %arg4: memref<1x128xf32, #tpu.memory_space<vmem>>, %arg5: memref<1x128xf32, #tpu.memory_space<vmem>>, %arg6: memref<128x128xbf16, #tpu.memory_space<vmem>>, %arg7: memref<1x128xf32, #tpu.memory_space<vmem>>, %arg8: memref<128x128xbf16, #tpu.memory_space<vmem>>, %arg9: memref<1x128xf32, #tpu.memory_space<vmem>>, %arg10: memref<1x128xf32, #tpu.memory_space<vmem>>, %arg11: memref<1x1xf32, #tpu.memory_space<vmem>>, %arg12: memref<32x1xf32, #tpu.memory_space<vmem>>) attributes {dimension_semantics = [#tpu.dimension_semantics<parallel>], iteration_bounds = array<i64: 2>, scalar_prefetch = 0 : i64, scratch_operands = 0 : i64, tpu.core_type = #tpu.core_type<tc>, window_params = [{transform_indices = @transform_0, window_bounds = array<i64: 32, 16>}, {pipeline_mode = #tpu.pipeline_mode<synchronous>, transform_indices = @transform_1, window_bounds = array<i64: 16, 128>}, {pipeline_mode = #tpu.pipeline_mode<synchronous>, transform_indices = @transform_2, window_bounds = array<i64: 1, 128>}, {pipeline_mode = #tpu.pipeline_mode<synchronous>, transform_indices = @transform_3, window_bounds = array<i64: 1, 128>}, {pipeline_mode = #tpu.pipeline_mode<synchronous>, transform_indices = @transform_4, window_bounds = array<i64: 1, 128>}, {pipeline_mode = #tpu.pipeline_mode<synchronous>, transform_indices = @transform_5, window_bounds = array<i64: 128, 128>}, {pipeline_mode = #tpu.pipeline_mode<synchronous>, transform_indices = @transform_6, window_bounds = array<i64: 1, 128>}, {pipeline_mode = #tpu.pipeline_mode<synchronous>, transform_indices = @transform_7, window_bounds = array<i64: 128, 128>}, {pipeline_mode = #tpu.pipeline_mode<synchronous>, transform_indices = @transform_8, window_bounds = array<i64: 1, 128>}, {pipeline_mode = #tpu.pipeline_mode<synchronous>, transform_indices = @transform_9, window_bounds = array<i64: 1, 128>}, {pipeline_mode = #tpu.pipeline_mode<synchronous>, transform_indices = @transform_10, window_bounds = array<i64: 1, 1>}, {transform_indices = @transform_11, window_bounds = array<i64: 32, 1>}]} {
    %c0 = arith.constant 0 : index
    %c0_0 = arith.constant 0 : index
    %0 = vector.load %arg1[%c0, %c0_0] : memref<32x16xf32, #tpu.memory_space<vmem>>, vector<32x16xf32>
    %1 = arith.truncf %0 : vector<32x16xf32> to vector<32x16xbf16>
    %c0_1 = arith.constant 0 : index
    %c0_2 = arith.constant 0 : index
    %2 = vector.load %arg2[%c0_1, %c0_2] : memref<16x128xbf16, #tpu.memory_space<vmem>>, vector<16x128xbf16>
    %cst = arith.constant dense<0.000000e+00> : vector<32x128xf32>
    %3 = tpu.matmul %1, %2, %cst {dimension_numbers = #tpu.dot_dimension_numbers<[1], [0], [0], [1], [0, 0, 1, 1], [], []>} : vector<32x16xbf16>, vector<16x128xbf16>, vector<32x128xf32> -> vector<32x128xf32>
    %c0_3 = arith.constant 0 : index
    %c0_4 = arith.constant 0 : index
    %4 = vector.load %arg3[%c0_3, %c0_4] : memref<1x128xf32, #tpu.memory_space<vmem>>, vector<1x128xf32>
    %5 = vector.broadcast %4 : vector<1x128xf32> to vector<32x128xf32>
    %6 = arith.addf %3, %5 : vector<32x128xf32>
    %cst_5 = arith.constant dense<0.000000e+00> : vector<32xf32>
    %7 = vector.multi_reduction <add>, %6, %cst_5 [1] : vector<32x128xf32> to vector<32xf32>
    %8 = vector.shape_cast %7 : vector<32xf32> to vector<32x1xf32>
    %cst_6 = arith.constant 1.280000e+02 : f32
    %9 = vector.broadcast %cst_6 : f32 to vector<32x1xf32>
    %10 = arith.divf %8, %9 : vector<32x1xf32>
    %11 = vector.broadcast %10 : vector<32x1xf32> to vector<32x128xf32>
    %12 = arith.subf %6, %11 : vector<32x128xf32>
    %13 = arith.mulf %12, %12 : vector<32x128xf32>
    %cst_7 = arith.constant dense<0.000000e+00> : vector<32xf32>
    %14 = vector.multi_reduction <add>, %13, %cst_7 [1] : vector<32x128xf32> to vector<32xf32>
    %15 = vector.shape_cast %14 : vector<32xf32> to vector<32x1xf32>
    %cst_8 = arith.constant 1.280000e+02 : f32
    %16 = vector.broadcast %cst_8 : f32 to vector<32x1xf32>
    %17 = arith.divf %15, %16 : vector<32x1xf32>
    %cst_9 = arith.constant 9.99999974E-6 : f32
    %18 = vector.broadcast %cst_9 : f32 to vector<32x1xf32>
    %19 = arith.addf %17, %18 : vector<32x1xf32>
    %20 = math.rsqrt %19 : vector<32x1xf32>
    %21 = vector.broadcast %20 : vector<32x1xf32> to vector<32x128xf32>
    %22 = arith.mulf %12, %21 : vector<32x128xf32>
    %c0_10 = arith.constant 0 : index
    %c0_11 = arith.constant 0 : index
    %23 = vector.load %arg4[%c0_10, %c0_11] : memref<1x128xf32, #tpu.memory_space<vmem>>, vector<1x128xf32>
    %24 = vector.broadcast %23 : vector<1x128xf32> to vector<32x128xf32>
    %25 = arith.mulf %22, %24 : vector<32x128xf32>
    %c0_12 = arith.constant 0 : index
    %c0_13 = arith.constant 0 : index
    %26 = vector.load %arg5[%c0_12, %c0_13] : memref<1x128xf32, #tpu.memory_space<vmem>>, vector<1x128xf32>
    %27 = vector.broadcast %26 : vector<1x128xf32> to vector<32x128xf32>
    %28 = arith.addf %25, %27 : vector<32x128xf32>
    %cst_14 = arith.constant 0.000000e+00 : f32
    %29 = vector.broadcast %cst_14 : f32 to vector<32x128xf32>
    %30 = arith.maximumf %28, %29 : vector<32x128xf32>
    %31 = arith.truncf %30 : vector<32x128xf32> to vector<32x128xbf16>
    %c0_15 = arith.constant 0 : index
    %c0_16 = arith.constant 0 : index
    %32 = vector.load %arg6[%c0_15, %c0_16] : memref<128x128xbf16, #tpu.memory_space<vmem>>, vector<128x128xbf16>
    %cst_17 = arith.constant dense<0.000000e+00> : vector<32x128xf32>
    %33 = tpu.matmul %31, %32, %cst_17 {dimension_numbers = #tpu.dot_dimension_numbers<[1], [0], [0], [1], [0, 0, 1, 1], [], []>} : vector<32x128xbf16>, vector<128x128xbf16>, vector<32x128xf32> -> vector<32x128xf32>
    %c0_18 = arith.constant 0 : index
    %c0_19 = arith.constant 0 : index
    %34 = vector.load %arg7[%c0_18, %c0_19] : memref<1x128xf32, #tpu.memory_space<vmem>>, vector<1x128xf32>
    %35 = vector.broadcast %34 : vector<1x128xf32> to vector<32x128xf32>
    %36 = arith.addf %33, %35 : vector<32x128xf32>
    %cst_20 = arith.constant 0.000000e+00 : f32
    %37 = vector.broadcast %cst_20 : f32 to vector<32x128xf32>
    %38 = arith.maximumf %36, %37 : vector<32x128xf32>
    %39 = arith.truncf %38 : vector<32x128xf32> to vector<32x128xbf16>
    %c0_21 = arith.constant 0 : index
    %c0_22 = arith.constant 0 : index
    %40 = vector.load %arg8[%c0_21, %c0_22] : memref<128x128xbf16, #tpu.memory_space<vmem>>, vector<128x128xbf16>
    %cst_23 = arith.constant dense<0.000000e+00> : vector<32x128xf32>
    %41 = tpu.matmul %39, %40, %cst_23 {dimension_numbers = #tpu.dot_dimension_numbers<[1], [0], [0], [1], [0, 0, 1, 1], [], []>} : vector<32x128xbf16>, vector<128x128xbf16>, vector<32x128xf32> -> vector<32x128xf32>
    %c0_24 = arith.constant 0 : index
    %c0_25 = arith.constant 0 : index
    %42 = vector.load %arg9[%c0_24, %c0_25] : memref<1x128xf32, #tpu.memory_space<vmem>>, vector<1x128xf32>
    %43 = vector.broadcast %42 : vector<1x128xf32> to vector<32x128xf32>
    %44 = arith.addf %41, %43 : vector<32x128xf32>
    %cst_26 = arith.constant 0.000000e+00 : f32
    %45 = vector.broadcast %cst_26 : f32 to vector<32x128xf32>
    %46 = arith.maximumf %44, %45 : vector<32x128xf32>
    %c0_27 = arith.constant 0 : index
    %c0_28 = arith.constant 0 : index
    %47 = vector.load %arg10[%c0_27, %c0_28] : memref<1x128xf32, #tpu.memory_space<vmem>>, vector<1x128xf32>
    %48 = vector.broadcast %47 : vector<1x128xf32> to vector<32x128xf32>
    %49 = arith.mulf %46, %48 : vector<32x128xf32>
    %cst_29 = arith.constant dense<0.000000e+00> : vector<32xf32>
    %50 = vector.multi_reduction <add>, %49, %cst_29 [1] : vector<32x128xf32> to vector<32xf32>
    %51 = vector.shape_cast %50 : vector<32xf32> to vector<32x1xf32>
    %c0_30 = arith.constant 0 : index
    %c0_31 = arith.constant 0 : index
    %52 = vector.load %arg11[%c0_30, %c0_31] : memref<1x1xf32, #tpu.memory_space<vmem>>, vector<1x1xf32>
    %53 = vector.broadcast %52 : vector<1x1xf32> to vector<32x1xf32>
    %54 = arith.addf %51, %53 : vector<32x1xf32>
    %c0_32 = arith.constant 0 : index
    %c0_33 = arith.constant 0 : index
    %55 = vector.load %arg12[%c0_32, %c0_33] : memref<32x1xf32, #tpu.memory_space<vmem>>, vector<32x1xf32>
    tpu.vector_store %arg12[%c0_32, %c0_33], %54 {strides = array<i32>} : memref<32x1xf32, #tpu.memory_space<vmem>>, vector<32x1xf32>,
    return
  }
  func.func @transform_0(%arg0: i32) -> (i32, i32) {
    %c0_i32 = arith.constant 0 : i32
    %c0_i32_0 = arith.constant 0 : i32
    return %arg0, %c0_i32 : i32, i32
  }
  func.func @transform_1(%arg0: i32) -> (i32, i32) {
    %c0_i32 = arith.constant 0 : i32
    %c0_i32_0 = arith.constant 0 : i32
    %c0_i32_1 = arith.constant 0 : i32
    return %c0_i32, %c0_i32_0 : i32, i32
  }
  func.func @transform_2(%arg0: i32) -> (i32, i32) {
    %c0_i32 = arith.constant 0 : i32
    %c0_i32_0 = arith.constant 0 : i32
    %c0_i32_1 = arith.constant 0 : i32
    return %c0_i32, %c0_i32_0 : i32, i32
  }
  func.func @transform_3(%arg0: i32) -> (i32, i32) {
    %c0_i32 = arith.constant 0 : i32
    %c0_i32_0 = arith.constant 0 : i32
    %c0_i32_1 = arith.constant 0 : i32
    return %c0_i32, %c0_i32_0 : i32, i32
  }
  func.func @transform_4(%arg0: i32) -> (i32, i32) {
    %c0_i32 = arith.constant 0 : i32
    %c0_i32_0 = arith.constant 0 : i32
    %c0_i32_1 = arith.constant 0 : i32
    return %c0_i32, %c0_i32_0 : i32, i32
  }
  func.func @transform_5(%arg0: i32) -> (i32, i32) {
    %c0_i32 = arith.constant 0 : i32
    %c0_i32_0 = arith.constant 0 : i32
    %c0_i32_1 = arith.constant 0 : i32
    return %c0_i32, %c0_i32_0 : i32, i32
  }
  func.func @transform_6(%arg0: i32) -> (i32, i32) {
    %c0_i32 = arith.constant 0 : i32
    %c0_i32_0 = arith.constant 0 : i32
    %c0_i32_1 = arith.constant 0 : i32
    return %c0_i32, %c0_i32_0 : i32, i32
  }
  func.func @transform_7(%arg0: i32) -> (i32, i32) {
    %c0_i32 = arith.constant 0 : i32
    %c0_i32_0 = arith.constant 0 : i32
    %c0_i32_1 = arith.constant 0 : i32
    return %c0_i32, %c0_i32_0 : i32, i32
  }
  func.func @transform_8(%arg0: i32) -> (i32, i32) {
    %c0_i32 = arith.constant 0 : i32
    %c0_i32_0 = arith.constant 0 : i32
    %c0_i32_1 = arith.constant 0 : i32
    return %c0_i32, %c0_i32_0 : i32, i32
  }
  func.func @transform_9(%arg0: i32) -> (i32, i32) {
    %c0_i32 = arith.constant 0 : i32
    %c0_i32_0 = arith.constant 0 : i32
    %c0_i32_1 = arith.constant 0 : i32
    return %c0_i32, %c0_i32_0 : i32, i32
  }
  func.func @transform_10(%arg0: i32) -> (i32, i32) {
    %c0_i32 = arith.constant 0 : i32
    %c0_i32_0 = arith.constant 0 : i32
    %c0_i32_1 = arith.constant 0 : i32
    return %c0_i32, %c0_i32_0 : i32, i32
  }
  func.func @transform_11(%arg0: i32) -> (i32, i32) {
    %c0_i32 = arith.constant 0 : i32
    %c0_i32_0 = arith.constant 0 : i32
    return %arg0, %c0_i32 : i32, i32
  }
}

</mosaic_0001>

<llo_original>
// kernel: tpu_custom_call.1
$region0: #{tpu_custom_call.1}
  #allocation0 [shape = 'u32[]', space=smem, size = 0x4, offset = 0x4, fixed_abs, tag = 'smem constant byte address 0x4 - core index']
  #allocation1 [shape = 'u32[144,128]{1,0:T(1,128)}', space=vmem, size = 0x12000, scoped, tag = 'internal scratch']
  #allocation2 [shape = 'f32[1,1]{1,0:T(1,128)S(1)}', space=vmem, size = 0x200, scoped, tag = 'scoped memory for tpu_custom_call.1']
  %s0 = inlined_call_operand.vmem [shape: f32[64,16], index: 0, kind: input, shape index: {}]
  %s1 = inlined_call_operand.vmem [shape: bf16[16,128], index: 1, kind: input, shape index: {}]
  %s2 = inlined_call_operand.vmem [shape: f32[1,128], index: 2, kind: input, shape index: {}]
  %s3 = inlined_call_operand.vmem [shape: f32[1,128], index: 3, kind: input, shape index: {}]
  %s4 = inlined_call_operand.vmem [shape: f32[1,128], index: 4, kind: input, shape index: {}]
  %s5 = inlined_call_operand.vmem [shape: bf16[128,128], index: 5, kind: input, shape index: {}]
  %s6 = inlined_call_operand.vmem [shape: f32[1,128], index: 6, kind: input, shape index: {}]
  %s7 = inlined_call_operand.hbm [shape: bf16[128,128], index: 7, kind: input, shape index: {}]
  %s8 = inlined_call_operand.vmem [shape: f32[1,128], index: 8, kind: input, shape index: {}]
  %s9 = inlined_call_operand.vmem [shape: f32[1,128], index: 9, kind: input, shape index: {}]
  %s10 = inlined_call_operand.<no memory space> [shape: f32[1,1], index: 10, kind: input, shape index: {}]
  %s11 = inlined_call_operand.vmem [shape: f32[64,1], index: 11, kind: output, shape index: {}]
  %s12 = sld [smem:[#allocation0]]
  $region81: #{tpu_custom_call.1} parent=0
    _
  %s14 = ssub.s32 1, %s12
  %s15 = scalar_select 0, %s14, %s12
  %v16 = vstv %s10
  %17 = vst [vmem:[#allocation2] sm:$0x1] %v16
  $region1: #{tpu_custom_call.1} parent=0
    #allocation3 [shape = 'u8[32768]{0}', space=vmem, size = 0x8000, scoped, tag = 'input window, operand 7, single buffered']
    #allocation4 [shape = 's32[2]{0}', space=sflag, size = 0x8, scoped, tag = 'scoped memory for tpu_custom_call.1']
    %18 = vsyncpa [#allocation4], 0
    loop: start=0, step=1, limit=4
    $region2: #{tpu_custom_call.1} parent=1 // loop_pre_header
      _
    $region3: #{tpu_custom_call.1} parent=1 // loop_header
      %s20 = sphi 0, %s24
      %p21 = scmp.ge.s32.totalorder %s20, 4
      %s30 = sphi 0, %s32
      %s33 = sphi 0, %s30
      %s34 = sphi 0, %s33
      %s50 = sphi 0, %s34
      %s54 = sphi 0, %s54
      %s56 = sphi 0, %s54
      %s57 = sphi 0, %s56
      %s71 = sphi 0, %s57
      %s75 = sphi 0, %s75
      %s77 = sphi 0, %s75
      %s78 = sphi 0, %s77
      %s92 = sphi 0, %s78
      %s96 = sphi 0, %s96
      %s98 = sphi 0, %s96
      %s99 = sphi 0, %s98
      %s113 = sphi 0, %s99
      %s117 = sphi 0, %s117
      %s119 = sphi 0, %s117
      %s120 = sphi 0, %s119
      %s134 = sphi 0, %s120
      %s138 = sphi 0, %s138
      %s140 = sphi 0, %s138
      %s141 = sphi 0, %s140
      %s155 = sphi 0, %s141
      %s159 = sphi 0, %s159
      %s161 = sphi 0, %s159
      %s162 = sphi 0, %s161
      %s176 = sphi 0, %s162
      %s180 = sphi 0, %s180
      %s182 = sphi 0, %s180
      %s183 = sphi 0, %s182
      %s197 = sphi 0, %s183
      %s201 = sphi 0, %s201
      %s203 = sphi 0, %s201
      %s204 = sphi 0, %s203
      %s218 = sphi 0, %s204
      %s222 = sphi 0, %s222
      %s224 = sphi 0, %s222
      %s225 = sphi 0, %s224
      %s239 = sphi 0, %s225
      %s243 = sphi 0, %s243
      %s245 = sphi 0, %s243
      %s246 = sphi 0, %s245
      %s260 = sphi 0, %s246
      %s266 = sphi 0, %s268
      %s269 = sphi 0, %s266
      %s270 = sphi 0, %s269
      %s286 = sphi 0, %s270
    $region4: #{tpu_custom_call.1} parent=1 // loop_header_branch
      %23 = sbr.rel (%p21) target = $region8
    $region5: #{tpu_custom_call.1} parent=1 // loop_body
      %s25 = ssub.s32 %s20, 1
      %s26 = ssub.s32 %s20, 2
      %s27 = sadd.s32 %s20, 1
      %s28 = ssub.s32 %s20, %s27
      %p29 = scmp.eq.s32.totalorder %s28, 0
      %s31 = sadd.s32 %s30, 1
      %s32 = scalar_select %p29, %s30, %s31
      %p35 = pneg %p29
      %p36 = scmp.eq.s32.totalorder %s20, 1
      %p37 = por %p35, %p36
      %p38 = scmp.ne.s32.totalorder %s30, %s33
      %p39 = scmp.eq.s32.totalorder %s20, 0
      %p40 = por %p38, %p39
      %p41 = scmp.ne.s32.totalorder %s30, %s33
      %p42 = scmp.eq.s32.totalorder %s25, 1
      %p43 = por %p41, %p42
      %p44 = scmp.ne.s32.totalorder %s33, %s34
      %p45 = scmp.eq.s32.totalorder %s25, 0
      %p46 = por %p44, %p45
      %p47 = scmp.ne.s32.totalorder %s33, %s34
      %p48 = scmp.eq.s32.totalorder %s26, 1
      %p49 = por %p47, %p48
      %p51 = scmp.ne.s32.totalorder %s34, %s50
      %p52 = scmp.eq.s32.totalorder %s26, 0
      %p53 = por %p51, %p52
      %s55 = sadd.s32 %s54, 1
      %p58 = scmp.eq.s32.totalorder %s20, 1
      %p59 = scmp.ne.s32.totalorder %s54, %s56
      %p60 = scmp.eq.s32.totalorder %s20, 0
      %p61 = por %p59, %p60
      %p62 = scmp.ne.s32.totalorder %s54, %s56
      %p63 = scmp.eq.s32.totalorder %s25, 1
      %p64 = por %p62, %p63
      %p65 = scmp.ne.s32.totalorder %s56, %s57
      %p66 = scmp.eq.s32.totalorder %s25, 0
      %p67 = por %p65, %p66
      %p68 = scmp.ne.s32.totalorder %s56, %s57
      %p69 = scmp.eq.s32.totalorder %s26, 1
      %p70 = por %p68, %p69
      %p72 = scmp.ne.s32.totalorder %s57, %s71
      %p73 = scmp.eq.s32.totalorder %s26, 0
      %p74 = por %p72, %p73
      %s76 = sadd.s32 %s75, 1
      %p79 = scmp.eq.s32.totalorder %s20, 1
      %p80 = scmp.ne.s32.totalorder %s75, %s77
      %p81 = scmp.eq.s32.totalorder %s20, 0
      %p82 = por %p80, %p81
      %p83 = scmp.ne.s32.totalorder %s75, %s77
      %p84 = scmp.eq.s32.totalorder %s25, 1
      %p85 = por %p83, %p84
      %p86 = scmp.ne.s32.totalorder %s77, %s78
      %p87 = scmp.eq.s32.totalorder %s25, 0
      %p88 = por %p86, %p87
      %p89 = scmp.ne.s32.totalorder %s77, %s78
      %p90 = scmp.eq.s32.totalorder %s26, 1
      %p91 = por %p89, %p90
      %p93 = scmp.ne.s32.totalorder %s78, %s92
      %p94 = scmp.eq.s32.totalorder %s26, 0
      %p95 = por %p93, %p94
      %s97 = sadd.s32 %s96, 1
      %p100 = scmp.eq.s32.totalorder %s20, 1
      %p101 = scmp.ne.s32.totalorder %s96, %s98
      %p102 = scmp.eq.s32.totalorder %s20, 0
      %p103 = por %p101, %p102
      %p104 = scmp.ne.s32.totalorder %s96, %s98
      %p105 = scmp.eq.s32.totalorder %s25, 1
      %p106 = por %p104, %p105
      %p107 = scmp.ne.s32.totalorder %s98, %s99
      %p108 = scmp.eq.s32.totalorder %s25, 0
      %p109 = por %p107, %p108
      %p110 = scmp.ne.s32.totalorder %s98, %s99
      %p111 = scmp.eq.s32.totalorder %s26, 1
      %p112 = por %p110, %p111
      %p114 = scmp.ne.s32.totalorder %s99, %s113
      %p115 = scmp.eq.s32.totalorder %s26, 0
      %p116 = por %p114, %p115
      %s118 = sadd.s32 %s117, 1
      %p121 = scmp.eq.s32.totalorder %s20, 1
      %p122 = scmp.ne.s32.totalorder %s117, %s119
      %p123 = scmp.eq.s32.totalorder %s20, 0
      %p124 = por %p122, %p123
      %p125 = scmp.ne.s32.totalorder %s117, %s119
      %p126 = scmp.eq.s32.totalorder %s25, 1
      %p127 = por %p125, %p126
      %p128 = scmp.ne.s32.totalorder %s119, %s120
      %p129 = scmp.eq.s32.totalorder %s25, 0
      %p130 = por %p128, %p129
      %p131 = scmp.ne.s32.totalorder %s119, %s120
      %p132 = scmp.eq.s32.totalorder %s26, 1
      %p133 = por %p131, %p132
      %p135 = scmp.ne.s32.totalorder %s120, %s134
      %p136 = scmp.eq.s32.totalorder %s26, 0
      %p137 = por %p135, %p136
      %s139 = sadd.s32 %s138, 1
      %p142 = scmp.eq.s32.totalorder %s20, 1
      %p143 = scmp.ne.s32.totalorder %s138, %s140
      %p144 = scmp.eq.s32.totalorder %s20, 0
      %p145 = por %p143, %p144
      %p146 = scmp.ne.s32.totalorder %s138, %s140
      %p147 = scmp.eq.s32.totalorder %s25, 1
      %p148 = por %p146, %p147
      %p149 = scmp.ne.s32.totalorder %s140, %s141
      %p150 = scmp.eq.s32.totalorder %s25, 0
      %p151 = por %p149, %p150
      %p152 = scmp.ne.s32.totalorder %s140, %s141
      %p153 = scmp.eq.s32.totalorder %s26, 1
      %p154 = por %p152, %p153
      %p156 = scmp.ne.s32.totalorder %s141, %s155
      %p157 = scmp.eq.s32.totalorder %s26, 0
      %p158 = por %p156, %p157
      %s160 = sadd.s32 %s159, 1
      %p163 = scmp.eq.s32.totalorder %s20, 1
      %p164 = scmp.ne.s32.totalorder %s159, %s161
      %p165 = scmp.eq.s32.totalorder %s20, 0
      %p166 = por %p164, %p165
      %p167 = scmp.ne.s32.totalorder %s159, %s161
      %p168 = scmp.eq.s32.totalorder %s25, 1
      %p169 = por %p167, %p168
      %p170 = scmp.ne.s32.totalorder %s161, %s162
      %p171 = scmp.eq.s32.totalorder %s25, 0
      %p172 = por %p170, %p171
      %p173 = scmp.ne.s32.totalorder %s161, %s162
      %p174 = scmp.eq.s32.totalorder %s26, 1
      %p175 = por %p173, %p174
      %p177 = scmp.ne.s32.totalorder %s162, %s176
      %p178 = scmp.eq.s32.totalorder %s26, 0
      %p179 = por %p177, %p178
      %s181 = sadd.s32 %s180, 1
      %p184 = scmp.eq.s32.totalorder %s20, 1
      %p185 = scmp.ne.s32.totalorder %s180, %s182
      %p186 = scmp.eq.s32.totalorder %s20, 0
      %p187 = por %p185, %p186
      %p188 = scmp.ne.s32.totalorder %s180, %s182
      %p189 = scmp.eq.s32.totalorder %s25, 1
      %p190 = por %p188, %p189
      %p191 = scmp.ne.s32.totalorder %s182, %s183
      %p192 = scmp.eq.s32.totalorder %s25, 0
      %p193 = por %p191, %p192
      %p194 = scmp.ne.s32.totalorder %s182, %s183
      %p195 = scmp.eq.s32.totalorder %s26, 1
      %p196 = por %p194, %p195
      %p198 = scmp.ne.s32.totalorder %s183, %s197
      %p199 = scmp.eq.s32.totalorder %s26, 0
      %p200 = por %p198, %p199
      %s202 = sadd.s32 %s201, 1
      %p205 = scmp.eq.s32.totalorder %s20, 1
      %p206 = scmp.ne.s32.totalorder %s201, %s203
      %p207 = scmp.eq.s32.totalorder %s20, 0
      %p208 = por %p206, %p207
      %p209 = scmp.ne.s32.totalorder %s201, %s203
      %p210 = scmp.eq.s32.totalorder %s25, 1
      %p211 = por %p209, %p210
      %p212 = scmp.ne.s32.totalorder %s203, %s204
      %p213 = scmp.eq.s32.totalorder %s25, 0
      %p214 = por %p212, %p213
      %p215 = scmp.ne.s32.totalorder %s203, %s204
      %p216 = scmp.eq.s32.totalorder %s26, 1
      %p217 = por %p215, %p216
      %p219 = scmp.ne.s32.totalorder %s204, %s218
      %p220 = scmp.eq.s32.totalorder %s26, 0
      %p221 = por %p219, %p220
      %s223 = sadd.s32 %s222, 1
      %p226 = scmp.eq.s32.totalorder %s20, 1
      %p227 = scmp.ne.s32.totalorder %s222, %s224
      %p228 = scmp.eq.s32.totalorder %s20, 0
      %p229 = por %p227, %p228
      %p230 = scmp.ne.s32.totalorder %s222, %s224
      %p231 = scmp.eq.s32.totalorder %s25, 1
      %p232 = por %p230, %p231
      %p233 = scmp.ne.s32.totalorder %s224, %s225
      %p234 = scmp.eq.s32.totalorder %s25, 0
      %p235 = por %p233, %p234
      %p236 = scmp.ne.s32.totalorder %s224, %s225
      %p237 = scmp.eq.s32.totalorder %s26, 1
      %p238 = por %p236, %p237
      %p240 = scmp.ne.s32.totalorder %s225, %s239
      %p241 = scmp.eq.s32.totalorder %s26, 0
      %p242 = por %p240, %p241
      %s244 = sadd.s32 %s243, 1
      %p247 = scmp.eq.s32.totalorder %s20, 1
      %p248 = scmp.ne.s32.totalorder %s243, %s245
      %p249 = scmp.eq.s32.totalorder %s20, 0
      %p250 = por %p248, %p249
      %p251 = scmp.ne.s32.totalorder %s243, %s245
      %p252 = scmp.eq.s32.totalorder %s25, 1
      %p253 = por %p251, %p252
      %p254 = scmp.ne.s32.totalorder %s245, %s246
      %p255 = scmp.eq.s32.totalorder %s25, 0
      %p256 = por %p254, %p255
      %p257 = scmp.ne.s32.totalorder %s245, %s246
      %p258 = scmp.eq.s32.totalorder %s26, 1
      %p259 = por %p257, %p258
      %p261 = scmp.ne.s32.totalorder %s246, %s260
      %p262 = scmp.eq.s32.totalorder %s26, 0
      %p263 = por %p261, %p262
      %s264 = ssub.s32 %s20, %s27
      %p265 = scmp.eq.s32.totalorder %s264, 0
      %s267 = sadd.s32 %s266, 1
      %s268 = scalar_select %p265, %s266, %s267
      %p271 = pneg %p265
      %p272 = scmp.eq.s32.totalorder %s20, 1
      %p273 = por %p271, %p272
      %p274 = scmp.ne.s32.totalorder %s266, %s269
      %p275 = scmp.eq.s32.totalorder %s20, 0
      %p276 = por %p274, %p275
      %p277 = scmp.ne.s32.totalorder %s266, %s269
      %p278 = scmp.eq.s32.totalorder %s25, 1
      %p279 = por %p277, %p278
      %p280 = scmp.ne.s32.totalorder %s269, %s270
      %p281 = scmp.eq.s32.totalorder %s25, 0
      %p282 = por %p280, %p281
      %p283 = scmp.ne.s32.totalorder %s269, %s270
      %p284 = scmp.eq.s32.totalorder %s26, 1
      %p285 = por %p283, %p284
      %p287 = scmp.ne.s32.totalorder %s270, %s286
      %p288 = scmp.eq.s32.totalorder %s26, 0
      %p289 = por %p287, %p288
      %p290 = scmp.le.s32.totalorder 1, %s20
      %p291 = scmp.lt.s32.totalorder %s20, 3
      %p292 = pnand %p290, %p291
      %p293 = pneg %p292
      // Predicated region
      $region9: #{tpu_custom_call.1} parent=5 // pred_check
        _
      $region10: #{tpu_custom_call.1} parent=5 // pred_check_branch
        %295 = sbr.rel (%p292) target = $region12
      $region11: #{tpu_custom_call.1} parent=5 // pred_region
        %s296 = ssub.s32 %s20, 1
        // Predicated region
        $region13: #{tpu_custom_call.1} parent=11 // pred_check
          %p297 = pneg %p67
        $region14: #{tpu_custom_call.1} parent=11 // pred_check_branch
          %299 = sbr.rel (%p297) target = $region16
        $region15: #{tpu_custom_call.1} parent=11 // pred_region
          _
        $region16: #{tpu_custom_call.1} parent=11 // pred_fallthru
          _
        // Predicated region
        $region17: #{tpu_custom_call.1} parent=11 // pred_check
          %p300 = pneg %p88
        $region18: #{tpu_custom_call.1} parent=11 // pred_check_branch
          %302 = sbr.rel (%p300) target = $region20
        $region19: #{tpu_custom_call.1} parent=11 // pred_region
          _
        $region20: #{tpu_custom_call.1} parent=11 // pred_fallthru
          _
        // Predicated region
        $region21: #{tpu_custom_call.1} parent=11 // pred_check
          %p303 = pneg %p109
        $region22: #{tpu_custom_call.1} parent=11 // pred_check_branch
          %305 = sbr.rel (%p303) target = $region24
        $region23: #{tpu_custom_call.1} parent=11 // pred_region
          _
        $region24: #{tpu_custom_call.1} parent=11 // pred_fallthru
          _
        // Predicated region
        $region25: #{tpu_custom_call.1} parent=11 // pred_check
          %p306 = pneg %p130
        $region26: #{tpu_custom_call.1} parent=11 // pred_check_branch
          %308 = sbr.rel (%p306) target = $region28
        $region27: #{tpu_custom_call.1} parent=11 // pred_region
          _
        $region28: #{tpu_custom_call.1} parent=11 // pred_fallthru
          _
        // Predicated region
        $region29: #{tpu_custom_call.1} parent=11 // pred_check
          %p309 = pneg %p151
        $region30: #{tpu_custom_call.1} parent=11 // pred_check_branch
          %311 = sbr.rel (%p309) target = $region32
        $region31: #{tpu_custom_call.1} parent=11 // pred_region
          _
        $region32: #{tpu_custom_call.1} parent=11 // pred_fallthru
          _
        // Predicated region
        $region33: #{tpu_custom_call.1} parent=11 // pred_check
          %p312 = pneg %p172
        $region34: #{tpu_custom_call.1} parent=11 // pred_check_branch
          %314 = sbr.rel (%p312) target = $region36
        $region35: #{tpu_custom_call.1} parent=11 // pred_region
          _
        $region36: #{tpu_custom_call.1} parent=11 // pred_fallthru
          _
        // Predicated region
        $region37: #{tpu_custom_call.1} parent=11 // pred_check
          %p315 = pneg %p193
        $region38: #{tpu_custom_call.1} parent=11 // pred_check_branch
          %317 = sbr.rel (%p315) target = $region40
        $region39: #{tpu_custom_call.1} parent=11 // pred_region
          %s319 = ssub.s32 1024, 1024
          %320 = vsyncadd [#allocation4], %s319
          %s321 = sshll.u32 [#allocation3], 4
          %s322 = int_to_ptr.vmem [resolvable:$true] %s321
          %327 = dma.hbm_to_vmem [thread:$0]  %s7, 1024, %s322, [#allocation4], 64, 64, 4
        $region40: #{tpu_custom_call.1} parent=11 // pred_fallthru
          _
        // Predicated region
        $region41: #{tpu_custom_call.1} parent=11 // pred_check
          %p328 = pneg %p214
        $region42: #{tpu_custom_call.1} parent=11 // pred_check_branch
          %330 = sbr.rel (%p328) target = $region44
        $region43: #{tpu_custom_call.1} parent=11 // pred_region
          _
        $region44: #{tpu_custom_call.1} parent=11 // pred_fallthru
          _
        // Predicated region
        $region45: #{tpu_custom_call.1} parent=11 // pred_check
          %p331 = pneg %p235
        $region46: #{tpu_custom_call.1} parent=11 // pred_check_branch
          %333 = sbr.rel (%p331) target = $region48
        $region47: #{tpu_custom_call.1} parent=11 // pred_region
          _
        $region48: #{tpu_custom_call.1} parent=11 // pred_fallthru
          _
        // Predicated region
        $region49: #{tpu_custom_call.1} parent=11 // pred_check
          %p334 = pneg %p256
        $region50: #{tpu_custom_call.1} parent=11 // pred_check_branch
          %336 = sbr.rel (%p334) target = $region52
        $region51: #{tpu_custom_call.1} parent=11 // pred_region
          _
        $region52: #{tpu_custom_call.1} parent=11 // pred_fallthru
          _
      $region12: #{tpu_custom_call.1} parent=5 // pred_fallthru
        _
      %p337 = scmp.lt.s32.totalorder %s20, 2
      // Predicated region
      $region53: #{tpu_custom_call.1} parent=5 // pred_check
        %p338 = pneg %p337
      $region54: #{tpu_custom_call.1} parent=5 // pred_check_branch
        %340 = sbr.rel (%p338) target = $region56
      $region55: #{tpu_custom_call.1} parent=5 // pred_region
        // Predicated region
        $region57: #{tpu_custom_call.1} parent=55 // pred_check
          %p341 = pneg %p40
        $region58: #{tpu_custom_call.1} parent=55 // pred_check_branch
          %343 = sbr.rel (%p341) target = $region60
        $region59: #{tpu_custom_call.1} parent=55 // pred_region
          %s344 = smul.u32 4, %s20
          %p345 = scmp.lt.s32.totalorder %s344, 7
          %s346 = scalar_select %p345, %s344, 7
          %s347 = smul.addr %s346, 8
          %s348 = scalar_lea.vmem %s0, %s347
          %s349 = smul.u32 4, %s20
        $region60: #{tpu_custom_call.1} parent=55 // pred_fallthru
          _
      $region56: #{tpu_custom_call.1} parent=5 // pred_fallthru
        _
      %p350 = scmp.le.s32.totalorder 1, %s20
      %p351 = scmp.lt.s32.totalorder %s20, 3
      %p352 = pnand %p350, %p351
      %p353 = pneg %p352
      // Predicated region
      $region61: #{tpu_custom_call.1} parent=5 // pred_check
        _
      $region62: #{tpu_custom_call.1} parent=5 // pred_check_branch
        %355 = sbr.rel (%p352) target = $region64
      $region63: #{tpu_custom_call.1} parent=5 // pred_region
        %s356 = ssub.s32 %s20, 1
        // Predicated region
        $region65: #{tpu_custom_call.1} parent=63 // pred_check
          %p357 = pneg %p193
        $region66: #{tpu_custom_call.1} parent=63 // pred_check_branch
          %359 = sbr.rel (%p357) target = $region68
        $region67: #{tpu_custom_call.1} parent=63 // pred_region
          %360 = dma.done [#allocation4], 1024
        $region68: #{tpu_custom_call.1} parent=63 // pred_fallthru
          _
        %s361 = smul.u32 4, %s25
        %p362 = scmp.lt.s32.totalorder %s361, 7
        %s363 = scalar_select %p362, %s361, 7
        %s364 = smul.addr %s363, 8
        %s365 = scalar_lea.vmem %s0, %s364
        %p366 = pneg %p46
        %p367 = pneg %p43
        %p368 = pneg %p67
        %p369 = pneg %p64
        %p370 = pneg %p88
        %p371 = pneg %p85
        %p372 = pneg %p109
        %p373 = pneg %p106
        %p374 = pneg %p130
        %p375 = pneg %p127
        %p376 = pneg %p151
        %p377 = pneg %p148
        %p378 = pneg %p172
        %p379 = pneg %p169
        %p380 = pneg %p193
        %p381 = pneg %p190
        %p382 = pneg %p214
        %p383 = pneg %p211
        %p384 = pneg %p235
        %p385 = pneg %p232
        %p386 = pneg %p256
        %p387 = pneg %p253
        %p388 = pneg %p282
        %p389 = pneg %p279
        %s390 = smul.u32 4, %s25
        %p391 = scmp.lt.s32.totalorder %s390, 7
        %s392 = scalar_select %p391, %s390, 7
        %s393 = smul.addr %s392, 8
        %s394 = scalar_lea.vmem %s11, %s393
        %s395 = smul.u32 4, %s25
        %p396 = scmp.lt.s32.totalorder %s395, 7
        %s397 = scalar_select %p396, %s395, 7
        %s398 = smul.addr %s397, 8
        %s399 = scalar_lea.vmem %s0, %s398
        %s400 = smul.u32 4, %s25
        %s401 = smul.u32 4, %s25
        %p402 = scmp.lt.s32.totalorder %s401, 7
        %s403 = scalar_select %p402, %s401, 7
        %s404 = smul.addr %s403, 8
        %s405 = scalar_lea.vmem %s11, %s404
        %s406 = smul.u32 4, %s25
        %v408 = vld [vmem:[%s399] sm:$0xff]
        %v409 = vld [vmem:[%s399 + $0x8] sm:$0xff]
        %v410 = vld [vmem:[%s399 + $0x10] sm:$0xff]
        %v411 = vld [vmem:[%s399 + $0x18] sm:$0xff]
        %v412 = vpack.c.bf16 %v409, %v408
        %v413 = vpack.c.bf16 %v411, %v410
        %v414 = vld [vmem:[%s1] sm:$0xf]
        %v415 = vld [vmem:[%s1 + $0x4] sm:$0xf]
        %v416 = vld [vmem:[%s2] sm:$0x1]
        %v418 = vlaneseq
        %v419 = vshrl.u32 %v418, 7
        %v420 = vsub.s32 0, %v419
        %v421 = vrot.slane %v416, %v420
        %v425 = vunpack.c.l.b16 %v414
        %v426 = vunpack.c.l.b16 %v415
        %v427 = vpack.c.b16 %v426, %v425
        %vm429 = vcmask 130048
        %v431 = vsel %vm429, %v412, 0
        %v434 = vsel %vm429, %v413, 0
        %436 = vmatprep.subr.bf16.mxu0 0
        %437 = vmatpush1.bf16.msra.mxu0 %v427
        %438 = vmatprep.subr.bf16.mxu0 0
        %439 = vmatpush1.bf16.msra.mxu0 0
        %440 = vmatprep.subr.bf16.mxu0 0
        %441 = vmatpush1.bf16.msra.mxu0 0
        %442 = vmatprep.subr.bf16.mxu0 0
        %443 = vmatpush1.bf16.msra.mxu0 0
        %444 = vmatprep.subr.bf16.mxu0 0
        %445 = vmatpush1.bf16.msra.mxu0 0
        %446 = vmatprep.subr.bf16.mxu0 0
        %447 = vmatpush1.bf16.msra.mxu0 0
        %448 = vmatprep.subr.bf16.mxu0 0
        %449 = vmatpush1.bf16.msra.mxu0 0
        %450 = vmatprep.subr.bf16.mxu0 0
        %451 = vmatpush1.bf16.msra.mxu0 0
        %452 = vmatprep.subr.bf16.mxu0 0
        %453 = vmatpush1.bf16.msra.mxu0 0
        %454 = vmatprep.subr.bf16.mxu0 0
        %455 = vmatpush1.bf16.msra.mxu0 0
        %456 = vmatprep.subr.bf16.mxu0 0
        %457 = vmatpush1.bf16.msra.mxu0 0
        %458 = vmatprep.subr.bf16.mxu0 0
        %459 = vmatpush1.bf16.msra.mxu0 0
        %460 = vmatprep.subr.bf16.mxu0 0
        %461 = vmatpush1.bf16.msra.mxu0 0
        %462 = vmatprep.subr.bf16.mxu0 0
        %463 = vmatpush1.bf16.msra.mxu0 0
        %464 = vmatprep.subr.bf16.mxu0 0
        %465 = vmatpush1.bf16.msra.mxu0 0
        %466 = vmatprep.subr.bf16.mxu0 0
        %467 = vmatpush1.bf16.msra.mxu0 0
        %468 = vmatprep.mubr.bf16.mxu0 0
        %469 = vmatmul.mubr.bf16.gmra.mrb[0].mxu0 %v431
        %v470 = vpop.f32.mrb[0].mxu0
        %v471 = vadd.f32 %v421, %v470
        %v472 = vpop.f32.mrb[0].mxu0
        %v473 = vpop.f32.mrb[0].mxu0
        %v474 = vadd.f32 %v421, %v473
        %v475 = vpop.f32.mrb[0].mxu0
        %476 = vmatprep.mubr.bf16.mxu0 0
        %477 = vmatmul.mubr.bf16.gmra.mrb[0].mxu0 %v434
        %v478 = vpop.f32.mrb[0].mxu0
        %v479 = vadd.f32 %v421, %v478
        %v480 = vpop.f32.mrb[0].mxu0
        %v481 = vpop.f32.mrb[0].mxu0
        %v482 = vadd.f32 %v421, %v481
        %v483 = vpop.f32.mrb[0].mxu0
        %484 = vdwg.mxu0
        %485 = vadd.xlane.f32.xlu0 %v471
        %v486 = vpop.xlane.xlu0 %485
        %487 = vadd.xlane.f32.xlu0 %v474
        %v488 = vpop.xlane.xlu0 %487
        %489 = vadd.xlane.f32.xlu0 %v479
        %v490 = vpop.xlane.xlu0 %489
        %491 = vadd.xlane.f32.xlu0 %v482
        %v492 = vpop.xlane.xlu0 %491
        %v493 = vrcp.pop 128.0
        %v494 = vmul.f32 %v486, %v493
        %v495 = vmul.f32 %v488, %v493
        %v496 = vmul.f32 %v490, %v493
        %v497 = vmul.f32 %v492, %v493
        %v498 = vsub.f32 %v471, %v494
        %v499 = vsub.f32 %v474, %v495
        %v500 = vsub.f32 %v479, %v496
        %v501 = vsub.f32 %v482, %v497
        %v502 = vmul.f32 %v498, %v498
        %v503 = vmul.f32 %v499, %v499
        %v504 = vmul.f32 %v500, %v500
        %v505 = vmul.f32 %v501, %v501
        %506 = vadd.xlane.f32.xlu0 %v502
        %v507 = vpop.xlane.xlu0 %506
        %508 = vadd.xlane.f32.xlu0 %v503
        %v509 = vpop.xlane.xlu0 %508
        %510 = vadd.xlane.f32.xlu0 %v504
        %v511 = vpop.xlane.xlu0 %510
        %512 = vadd.xlane.f32.xlu0 %v505
        %v513 = vpop.xlane.xlu0 %512
        %v514 = vmul.f32 %v507, %v493
        %v515 = vmul.f32 %v509, %v493
        %v516 = vmul.f32 %v511, %v493
        %v517 = vmul.f32 %v513, %v493
        %v518 = vadd.f32 %v514, 1e-05
        %v519 = vadd.f32 %v515, 1e-05
        %v520 = vadd.f32 %v516, 1e-05
        %v521 = vadd.f32 %v517, 1e-05
        %v522 = vrsqrt.pop %v518
        %v523 = vrsqrt.pop %v519
        %v524 = vrsqrt.pop %v520
        %v525 = vrsqrt.pop %v521
        %v526 = vmul.f32 %v498, %v522
        %v527 = vmul.f32 %v499, %v523
        %v528 = vmul.f32 %v500, %v524
        %v529 = vmul.f32 %v501, %v525
        %v530 = vld [vmem:[%s3] sm:$0x1]
        %v532 = vlaneseq
        %v533 = vshrl.u32 %v532, 7
        %v534 = vsub.s32 0, %v533
        %v535 = vrot.slane %v530, %v534
        %v537 = vmul.f32 %v526, %v535
        %v538 = vmul.f32 %v527, %v535
        %v539 = vmul.f32 %v528, %v535
        %v540 = vmul.f32 %v529, %v535
        %v541 = vld [vmem:[%s4] sm:$0x1]
        %v543 = vlaneseq
        %v544 = vshrl.u32 %v543, 7
        %v545 = vsub.s32 0, %v544
        %v546 = vrot.slane %v541, %v545
        %v548 = vadd.f32 %v537, %v546
        %v549 = vadd.f32 %v538, %v546
        %v550 = vadd.f32 %v539, %v546
        %v551 = vadd.f32 %v540, %v546
        %v552 = vmax.f32 %v548, 0.0
        %v553 = vmax.f32 %v549, 0.0
        %v554 = vmax.f32 %v550, 0.0
        %v555 = vmax.f32 %v551, 0.0
        %v556 = vpack.c.bf16 %v553, %v552
        %v557 = vpack.c.bf16 %v555, %v554
        %v558 = vld [vmem:[%s5] sm:$0xf]
        %v559 = vld [vmem:[%s5 + $0x4] sm:$0xf]
        %v560 = vld [vmem:[%s5 + $0x8] sm:$0xf]
        %v561 = vld [vmem:[%s5 + $0xc] sm:$0xf]
        %v562 = vld [vmem:[%s5 + $0x10] sm:$0xf]
        %v563 = vld [vmem:[%s5 + $0x14] sm:$0xf]
        %v564 = vld [vmem:[%s5 + $0x18] sm:$0xf]
        %v565 = vld [vmem:[%s5 + $0x1c] sm:$0xf]
        %v566 = vld [vmem:[%s5 + $0x20] sm:$0xf]
        %v567 = vld [vmem:[%s5 + $0x24] sm:$0xf]
        %v568 = vld [vmem:[%s5 + $0x28] sm:$0xf]
        %v569 = vld [vmem:[%s5 + $0x2c] sm:$0xf]
        %v570 = vld [vmem:[%s5 + $0x30] sm:$0xf]
        %v571 = vld [vmem:[%s5 + $0x34] sm:$0xf]
        %v572 = vld [vmem:[%s5 + $0x38] sm:$0xf]
        %v573 = vld [vmem:[%s5 + $0x3c] sm:$0xf]
        %v574 = vld [vmem:[%s6] sm:$0x1]
        %v576 = vlaneseq
        %v577 = vshrl.u32 %v576, 7
        %v578 = vsub.s32 0, %v577
        %v579 = vrot.slane %v574, %v578
        %v597 = vunpack.c.l.b16 %v558
        %v598 = vunpack.c.l.b16 %v559
        %v599 = vunpack.c.l.b16 %v560
        %v600 = vunpack.c.l.b16 %v561
        %v601 = vunpack.c.l.b16 %v562
        %v602 = vunpack.c.l.b16 %v563
        %v603 = vunpack.c.l.b16 %v564
        %v604 = vunpack.c.l.b16 %v565
        %v605 = vunpack.c.l.b16 %v566
        %v606 = vunpack.c.l.b16 %v567
        %v607 = vunpack.c.l.b16 %v568
        %v608 = vunpack.c.l.b16 %v569
        %v609 = vunpack.c.l.b16 %v570
        %v610 = vunpack.c.l.b16 %v571
        %v611 = vunpack.c.l.b16 %v572
        %v612 = vunpack.c.l.b16 %v573
        %v613 = vpack.c.b16 %v598, %v597
        %v614 = vpack.c.b16 %v600, %v599
        %v615 = vpack.c.b16 %v602, %v601
        %v616 = vpack.c.b16 %v604, %v603
        %v617 = vpack.c.b16 %v606, %v605
        %v618 = vpack.c.b16 %v608, %v607
        %v619 = vpack.c.b16 %v610, %v609
        %v620 = vpack.c.b16 %v612, %v611
        %629 = vmatprep.subr.bf16.mxu0 0
        %630 = vmatpush1.bf16.msra.mxu0 %v613
        %631 = vmatprep.subr.bf16.mxu0 0
        %632 = vmatpush1.bf16.msra.mxu0 %v614
        %633 = vmatprep.subr.bf16.mxu0 0
        %634 = vmatpush1.bf16.msra.mxu0 %v615
        %635 = vmatprep.subr.bf16.mxu0 0
        %636 = vmatpush1.bf16.msra.mxu0 %v616
        %637 = vmatprep.subr.bf16.mxu0 0
        %638 = vmatpush1.bf16.msra.mxu0 %v617
        %639 = vmatprep.subr.bf16.mxu0 0
        %640 = vmatpush1.bf16.msra.mxu0 %v618
        %641 = vmatprep.subr.bf16.mxu0 0
        %642 = vmatpush1.bf16.msra.mxu0 %v619
        %643 = vmatprep.subr.bf16.mxu0 0
        %644 = vmatpush1.bf16.msra.mxu0 %v620
        %645 = vmatprep.subr.bf16.mxu0 0
        %646 = vmatpush1.bf16.msra.mxu0 0
        %647 = vmatprep.subr.bf16.mxu0 0
        %648 = vmatpush1.bf16.msra.mxu0 0
        %649 = vmatprep.subr.bf16.mxu0 0
        %650 = vmatpush1.bf16.msra.mxu0 0
        %651 = vmatprep.subr.bf16.mxu0 0
        %652 = vmatpush1.bf16.msra.mxu0 0
        %653 = vmatprep.subr.bf16.mxu0 0
        %654 = vmatpush1.bf16.msra.mxu0 0
        %655 = vmatprep.subr.bf16.mxu0 0
        %656 = vmatpush1.bf16.msra.mxu0 0
        %657 = vmatprep.subr.bf16.mxu0 0
        %658 = vmatpush1.bf16.msra.mxu0 0
        %659 = vmatprep.subr.bf16.mxu0 0
        %660 = vmatpush1.bf16.msra.mxu0 0
        %661 = vmatprep.mubr.bf16.mxu0 0
        %662 = vmatmul.mubr.bf16.gmra.mrb[0].mxu0 %v556
        %v663 = vpop.f32.mrb[0].mxu0
        %v664 = vadd.f32 %v579, %v663
        %v665 = vpop.f32.mrb[0].mxu0
        %v666 = vpop.f32.mrb[0].mxu0
        %v667 = vadd.f32 %v579, %v666
        %v668 = vpop.f32.mrb[0].mxu0
        %669 = vmatprep.mubr.bf16.mxu0 0
        %670 = vmatmul.mubr.bf16.gmra.mrb[0].mxu0 %v557
        %v671 = vpop.f32.mrb[0].mxu0
        %v672 = vadd.f32 %v579, %v671
        %v673 = vpop.f32.mrb[0].mxu0
        %v674 = vpop.f32.mrb[0].mxu0
        %v675 = vadd.f32 %v579, %v674
        %v676 = vpop.f32.mrb[0].mxu0
        %677 = vdwg.mxu0
        %v678 = vmax.f32 %v664, 0.0
        %v679 = vmax.f32 %v667, 0.0
        %v680 = vmax.f32 %v672, 0.0
        %v681 = vmax.f32 %v675, 0.0
        %v682 = vpack.c.bf16 %v679, %v678
        %v683 = vpack.c.bf16 %v681, %v680
        %v684 = vld [vmem:[#allocation3] sm:$0xf]
        %v685 = vld [vmem:[#allocation3 + $0x4] sm:$0xf]
        %v686 = vld [vmem:[#allocation3 + $0x8] sm:$0xf]
        %v687 = vld [vmem:[#allocation3 + $0xc] sm:$0xf]
        %v688 = vld [vmem:[#allocation3 + $0x10] sm:$0xf]
        %v689 = vld [vmem:[#allocation3 + $0x14] sm:$0xf]
        %v690 = vld [vmem:[#allocation3 + $0x18] sm:$0xf]
        %v691 = vld [vmem:[#allocation3 + $0x1c] sm:$0xf]
        %v692 = vld [vmem:[#allocation3 + $0x20] sm:$0xf]
        %v693 = vld [vmem:[#allocation3 + $0x24] sm:$0xf]
        %v694 = vld [vmem:[#allocation3 + $0x28] sm:$0xf]
        %v695 = vld [vmem:[#allocation3 + $0x2c] sm:$0xf]
        %v696 = vld [vmem:[#allocation3 + $0x30] sm:$0xf]
        %v697 = vld [vmem:[#allocation3 + $0x34] sm:$0xf]
        %v698 = vld [vmem:[#allocation3 + $0x38] sm:$0xf]
        %v699 = vld [vmem:[#allocation3 + $0x3c] sm:$0xf]
        %v700 = vld [vmem:[%s8] sm:$0x1]
        %v702 = vlaneseq
        %v703 = vshrl.u32 %v702, 7
        %v704 = vsub.s32 0, %v703
        %v705 = vrot.slane %v700, %v704
        %v723 = vunpack.c.l.b16 %v684
        %v724 = vunpack.c.l.b16 %v685
        %v725 = vunpack.c.l.b16 %v686
        %v726 = vunpack.c.l.b16 %v687
        %v727 = vunpack.c.l.b16 %v688
        %v728 = vunpack.c.l.b16 %v689
        %v729 = vunpack.c.l.b16 %v690
        %v730 = vunpack.c.l.b16 %v691
        %v731 = vunpack.c.l.b16 %v692
        %v732 = vunpack.c.l.b16 %v693
        %v733 = vunpack.c.l.b16 %v694
        %v734 = vunpack.c.l.b16 %v695
        %v735 = vunpack.c.l.b16 %v696
        %v736 = vunpack.c.l.b16 %v697
        %v737 = vunpack.c.l.b16 %v698
        %v738 = vunpack.c.l.b16 %v699
        %v739 = vpack.c.b16 %v724, %v723
        %v740 = vpack.c.b16 %v726, %v725
        %v741 = vpack.c.b16 %v728, %v727
        %v742 = vpack.c.b16 %v730, %v729
        %v743 = vpack.c.b16 %v732, %v731
        %v744 = vpack.c.b16 %v734, %v733
        %v745 = vpack.c.b16 %v736, %v735
        %v746 = vpack.c.b16 %v738, %v737
        %755 = vmatprep.subr.bf16.mxu0 0
        %756 = vmatpush1.bf16.msra.mxu0 %v739
        %757 = vmatprep.subr.bf16.mxu0 0
        %758 = vmatpush1.bf16.msra.mxu0 %v740
        %759 = vmatprep.subr.bf16.mxu0 0
        %760 = vmatpush1.bf16.msra.mxu0 %v741
        %761 = vmatprep.subr.bf16.mxu0 0
        %762 = vmatpush1.bf16.msra.mxu0 %v742
        %763 = vmatprep.subr.bf16.mxu0 0
        %764 = vmatpush1.bf16.msra.mxu0 %v743
        %765 = vmatprep.subr.bf16.mxu0 0
        %766 = vmatpush1.bf16.msra.mxu0 %v744
        %767 = vmatprep.subr.bf16.mxu0 0
        %768 = vmatpush1.bf16.msra.mxu0 %v745
        %769 = vmatprep.subr.bf16.mxu0 0
        %770 = vmatpush1.bf16.msra.mxu0 %v746
        %771 = vmatprep.subr.bf16.mxu0 0
        %772 = vmatpush1.bf16.msra.mxu0 0
        %773 = vmatprep.subr.bf16.mxu0 0
        %774 = vmatpush1.bf16.msra.mxu0 0
        %775 = vmatprep.subr.bf16.mxu0 0
        %776 = vmatpush1.bf16.msra.mxu0 0
        %777 = vmatprep.subr.bf16.mxu0 0
        %778 = vmatpush1.bf16.msra.mxu0 0
        %779 = vmatprep.subr.bf16.mxu0 0
        %780 = vmatpush1.bf16.msra.mxu0 0
        %781 = vmatprep.subr.bf16.mxu0 0
        %782 = vmatpush1.bf16.msra.mxu0 0
        %783 = vmatprep.subr.bf16.mxu0 0
        %784 = vmatpush1.bf16.msra.mxu0 0
        %785 = vmatprep.subr.bf16.mxu0 0
        %786 = vmatpush1.bf16.msra.mxu0 0
        %787 = vmatprep.mubr.bf16.mxu0 0
        %788 = vmatmul.mubr.bf16.gmra.mrb[0].mxu0 %v682
        %v789 = vpop.f32.mrb[0].mxu0
        %v790 = vadd.f32 %v705, %v789
        %v791 = vpop.f32.mrb[0].mxu0
        %v792 = vpop.f32.mrb[0].mxu0
        %v793 = vadd.f32 %v705, %v792
        %v794 = vpop.f32.mrb[0].mxu0
        %795 = vmatprep.mubr.bf16.mxu0 0
        %796 = vmatmul.mubr.bf16.gmra.mrb[0].mxu0 %v683
        %v797 = vpop.f32.mrb[0].mxu0
        %v798 = vadd.f32 %v705, %v797
        %v799 = vpop.f32.mrb[0].mxu0
        %v800 = vpop.f32.mrb[0].mxu0
        %v801 = vadd.f32 %v705, %v800
        %v802 = vpop.f32.mrb[0].mxu0
        %803 = vdwg.mxu0
        %v804 = vmax.f32 %v790, 0.0
        %v805 = vmax.f32 %v793, 0.0
        %v806 = vmax.f32 %v798, 0.0
        %v807 = vmax.f32 %v801, 0.0
        %v808 = vld [vmem:[%s9] sm:$0x1]
        %v810 = vlaneseq
        %v811 = vshrl.u32 %v810, 7
        %v812 = vsub.s32 0, %v811
        %v813 = vrot.slane %v808, %v812
        %v815 = vmul.f32 %v804, %v813
        %v816 = vmul.f32 %v805, %v813
        %v817 = vmul.f32 %v806, %v813
        %v818 = vmul.f32 %v807, %v813
        %819 = vadd.xlane.f32.xlu0 %v815
        %v820 = vpop.xlane.xlu0 %819
        %821 = vadd.xlane.f32.xlu0 %v816
        %v822 = vpop.xlane.xlu0 %821
        %823 = vadd.xlane.f32.xlu0 %v817
        %v824 = vpop.xlane.xlu0 %823
        %825 = vadd.xlane.f32.xlu0 %v818
        %v826 = vpop.xlane.xlu0 %825
        %v827 = vld [vmem:[#allocation2] sm:$0x1]
        %v829 = vlaneseq
        %v830 = vshrl.u32 %v829, 7
        %v831 = vsub.s32 0, %v830
        %v832 = vrot.slane %v827, %v831
        %v834 = vadd.f32 %v820, %v832
        %v835 = vadd.f32 %v822, %v832
        %v836 = vadd.f32 %v824, %v832
        %v837 = vadd.f32 %v826, %v832
        %vm838 = vcmask 7168
        %839 = vst.msk [vmem:[%s405] sm:$0xff] %vm838, %v834
        %840 = vst.msk [vmem:[%s405 + $0x8] sm:$0xff] %vm838, %v835
        %841 = vst.msk [vmem:[%s405 + $0x10] sm:$0xff] %vm838, %v836
        %842 = vst.msk [vmem:[%s405 + $0x18] sm:$0xff] %vm838, %v837
        %s843 = smul.u32 4, %s25
        %p844 = scmp.lt.s32.totalorder %s843, 7
        %s845 = scalar_select %p844, %s843, 7
        %s846 = smul.addr %s845, 8
        %s847 = scalar_lea.vmem %s11, %s846
        // Predicated region
        $region69: #{tpu_custom_call.1} parent=63 // pred_check
          %p848 = pneg %p279
        $region70: #{tpu_custom_call.1} parent=63 // pred_check_branch
          %850 = sbr.rel (%p848) target = $region72
        $region71: #{tpu_custom_call.1} parent=63 // pred_region
          %s851 = smul.u32 4, %s25
        $region72: #{tpu_custom_call.1} parent=63 // pred_fallthru
          _
      $region64: #{tpu_custom_call.1} parent=5 // pred_fallthru
        _
      %p852 = scmp.le.s32.totalorder 2, %s20
      // Predicated region
      $region73: #{tpu_custom_call.1} parent=5 // pred_check
        %p853 = pneg %p852
      $region74: #{tpu_custom_call.1} parent=5 // pred_check_branch
        %855 = sbr.rel (%p853) target = $region76
      $region75: #{tpu_custom_call.1} parent=5 // pred_region
        %s856 = ssub.s32 %s20, 2
        // Predicated region
        $region77: #{tpu_custom_call.1} parent=75 // pred_check
          %p857 = pneg %p285
        $region78: #{tpu_custom_call.1} parent=75 // pred_check_branch
          %859 = sbr.rel (%p857) target = $region80
        $region79: #{tpu_custom_call.1} parent=75 // pred_region
          %s860 = smul.u32 4, %s26
          %p861 = scmp.lt.s32.totalorder %s860, 7
          %s862 = scalar_select %p861, %s860, 7
          %s863 = smul.addr %s862, 8
          %s864 = scalar_lea.vmem %s11, %s863
        $region80: #{tpu_custom_call.1} parent=75 // pred_fallthru
          _
      $region76: #{tpu_custom_call.1} parent=5 // pred_fallthru
        _
    $region6: #{tpu_custom_call.1} parent=1 // loop_footer
      %s24 = sadd.s32 1, %s20
    $region7: #{tpu_custom_call.1} parent=1 // loop_footer_branch
      %19 = sbr.rel target = $region3
    $region8: #{tpu_custom_call.1} parent=1 // loop_exit
      _
    %865 = vsyncpa [#allocation4], 1
    %s866 = scalar_lea.sflag [#allocation4], 1
    %867 = vsyncpa %s866, 1

</llo_original>
